<compile_context>
chip_gen: v7x
topology: tpu7x:2x2x1
jax: 0.10.0
libtpu: 0.0.40
codegen_flags: <defaults>
</compile_context>

<pallas_src>
import functools

import jax
import jax.numpy as jnp
from jax.experimental import pallas as pl
from jax.experimental.pallas import tpu as pltpu

LANE = 128  # TPU lane width; feature dims are padded to multiples of this.


# ----------------------------- Pallas kernels -----------------------------

def _visual_fused_kernel(x_ref, pw_ref, pb_ref, w1_ref, b1_ref, w2_ref, b2_ref,
                         o_ref):
    # patch-embed linear -> Linear -> ReLU -> (Dropout=id) -> Linear -> Sigmoid
    vx = jnp.dot(x_ref[...], pw_ref[...], preferred_element_type=jnp.float32)
    vx = vx + pb_ref[...]
    h = jnp.dot(vx.astype(jnp.bfloat16), w1_ref[...],
                preferred_element_type=jnp.float32)
    h = jnp.maximum(h + b1_ref[...], 0.0)
    z = jnp.dot(h.astype(jnp.bfloat16), w2_ref[...],
                preferred_element_type=jnp.float32)
    z = z + b2_ref[...]
    # sigmoid = 1 / (1 + exp(-z)); exp on EUP, approx reciprocal stays off VALU
    o_ref[...] = pl.reciprocal(1.0 + jnp.exp(-z), approx=True)


def _token_fused_kernel(ids_ref, emb_ref, w1_ref, b1_ref, w2_ref, b2_ref,
                        o_ref, *, num_valid):
    # embedding gather (one-hot matmul) -> Linear -> ReLU -> Linear -> LogSoftmax
    ids = ids_ref[...]                                  # [tile, 1] int32
    tile = ids_ref.shape[0]
    vocab_k = emb_ref.shape[0]
    col_k = jax.lax.broadcasted_iota(jnp.int32, (tile, vocab_k), 1)
    onehot = (ids == col_k).astype(jnp.bfloat16)        # MXU-friendly gather
    vy = jnp.dot(onehot, emb_ref[...], preferred_element_type=jnp.float32)

    h = jnp.dot(vy.astype(jnp.bfloat16), w1_ref[...],
                preferred_element_type=jnp.float32)
    h = jnp.maximum(h + b1_ref[...], 0.0)
    z = jnp.dot(h.astype(jnp.bfloat16), w2_ref[...],
                preferred_element_type=jnp.float32)
    z = z + b2_ref[...]

    # mask padded vocab columns so they don't perturb the log-softmax
    col_n = jax.lax.broadcasted_iota(jnp.int32, z.shape, 1)
    z = jnp.where(col_n < num_valid, z, -1e30)
    m = jnp.max(z, axis=-1, keepdims=True)
    e = jnp.exp(z - m)
    lse = jnp.log(jnp.sum(e, axis=-1, keepdims=True)) + m
    o_ref[...] = z - lse


# ----------------------------- padding helpers -----------------------------

def _round_up(n, m):
    return ((n + m - 1) // m) * m


def _pad_axis(a, axis, multiple):
    pad = _round_up(a.shape[axis], multiple) - a.shape[axis]
    if pad == 0:
        return a
    widths = [(0, 0)] * a.ndim
    widths[axis] = (0, pad)
    return jnp.pad(a, widths)


def _pad2d(a, row_mult, col_mult):
    return _pad_axis(_pad_axis(a, 0, row_mult), 1, col_mult)


def _choose_row_tile(rows):
    # Big tiles keep the MXU busy (measured ~85% roofline at 256-512 rows vs
    # ~29% at 128); clamp so tiny demo inputs still compile to a single step.
    return min(256, _round_up(rows, 128))


_COMPILER_PARAMS = pltpu.CompilerParams(
    dimension_semantics=("parallel",),          # row grid shards across TCs on v7x
    vmem_limit_bytes=48 * 1024 * 1024,          # explicit budget, < 64 MiB (v7x)
)


# ----------------------------- wrappers ------------------------------------

def visual_branch_pallas(patches2d, pw, pb, w1, b1, w2, b2):
    rows = patches2d.shape[0]
    v_dim = w2.shape[1]

    tile = _choose_row_tile(rows)
    rows_p = _round_up(rows, tile)

    x = _pad2d(patches2d, tile, LANE).astype(jnp.bfloat16)
    pw_p = _pad2d(pw, LANE, LANE).astype(jnp.bfloat16)
    w1_p = _pad2d(w1, LANE, LANE).astype(jnp.bfloat16)
    w2_p = _pad2d(w2, LANE, LANE).astype(jnp.bfloat16)
    pb_p = _pad_axis(pb.reshape(1, -1), 1, LANE).astype(jnp.float32)
    b1_p = _pad_axis(b1.reshape(1, -1), 1, LANE).astype(jnp.float32)
    b2_p = _pad_axis(b2.reshape(1, -1), 1, LANE).astype(jnp.float32)

    x = _pad_axis(x, 0, tile)  # rows already padded to tile by _pad2d(tile,...)
    din_p, nd_p = pw_p.shape
    dff_p = w1_p.shape[1]
    vd_p = w2_p.shape[1]
    grid = (rows_p // tile,)

    flops = 2 * rows_p * (din_p * nd_p + nd_p * dff_p + dff_p * vd_p)
    bytes_acc = (x.size * 2 + (pw_p.size + w1_p.size + w2_p.size) * 2
                 + (pb_p.size + b1_p.size + b2_p.size) * 4 + rows_p * vd_p * 4)

    out = pl.pallas_call(
        _visual_fused_kernel,
        out_shape=jax.ShapeDtypeStruct((rows_p, vd_p), jnp.float32),
        grid_spec=pltpu.PrefetchScalarGridSpec(
            num_scalar_prefetch=0,
            grid=grid,
            in_specs=[
                pl.BlockSpec((tile, din_p), lambda i: (i, 0)),
                pl.BlockSpec((din_p, nd_p), lambda i: (0, 0)),
                pl.BlockSpec((1, nd_p), lambda i: (0, 0)),
                pl.BlockSpec((nd_p, dff_p), lambda i: (0, 0)),
                pl.BlockSpec((1, dff_p), lambda i: (0, 0)),
                pl.BlockSpec((dff_p, vd_p), lambda i: (0, 0)),
                pl.BlockSpec((1, vd_p), lambda i: (0, 0)),
            ],
            out_specs=pl.BlockSpec((tile, vd_p), lambda i: (i, 0)),
        ),
        compiler_params=_COMPILER_PARAMS,
        cost_estimate=pl.CostEstimate(
            flops=int(flops),
            transcendentals=int(rows_p * vd_p),
            bytes_accessed=int(bytes_acc)),
    )(x, pw_p, pb_p, w1_p, b1_p, w2_p, b2_p)
    return out[:rows, :v_dim]


def token_branch_pallas(y_flat, emb, w1, b1, w2, b2):
    rows = y_flat.shape[0]
    vocab_out = w2.shape[1]

    tile = _choose_row_tile(rows)
    rows_p = _round_up(rows, tile)

    ids = _pad_axis(y_flat.reshape(-1, 1).astype(jnp.int32), 0, tile)
    emb_p = _pad2d(emb, LANE, LANE).astype(jnp.bfloat16)
    w1_p = _pad2d(w1, LANE, LANE).astype(jnp.bfloat16)
    w2_p = _pad2d(w2, LANE, LANE).astype(jnp.bfloat16)
    b1_p = _pad_axis(b1.reshape(1, -1), 1, LANE).astype(jnp.float32)
    b2_p = _pad_axis(b2.reshape(1, -1), 1, LANE).astype(jnp.float32)

    vocab_k, nd_p = emb_p.shape
    dff_p = w1_p.shape[1]
    vout_p = w2_p.shape[1]
    grid = (rows_p // tile,)

    flops = 2 * rows_p * (vocab_k * nd_p + nd_p * dff_p + dff_p * vout_p)
    bytes_acc = (ids.size * 4 + (emb_p.size + w1_p.size + w2_p.size) * 2
                 + (b1_p.size + b2_p.size) * 4 + rows_p * vout_p * 4)

    kernel = functools.partial(_token_fused_kernel, num_valid=vocab_out)
    out = pl.pallas_call(
        kernel,
        out_shape=jax.ShapeDtypeStruct((rows_p, vout_p), jnp.float32),
        grid_spec=pltpu.PrefetchScalarGridSpec(
            num_scalar_prefetch=0,
            grid=grid,
            in_specs=[
                pl.BlockSpec((tile, 1), lambda i: (i, 0)),
                pl.BlockSpec((vocab_k, nd_p), lambda i: (0, 0)),
                pl.BlockSpec((nd_p, dff_p), lambda i: (0, 0)),
                pl.BlockSpec((1, dff_p), lambda i: (0, 0)),
                pl.BlockSpec((dff_p, vout_p), lambda i: (0, 0)),
                pl.BlockSpec((1, vout_p), lambda i: (0, 0)),
            ],
            out_specs=pl.BlockSpec((tile, vout_p), lambda i: (i, 0)),
        ),
        compiler_params=_COMPILER_PARAMS,
        cost_estimate=pl.CostEstimate(
            flops=int(flops),
            transcendentals=int(2 * rows_p * vout_p),
            bytes_accessed=int(bytes_acc)),
    )(ids, emb_p, w1_p, b1_p, w2_p, b2_p)
    return out[:rows, :vocab_out]


# ----------------------------- model glue ----------------------------------

def patchify(x, p):
    # x: [B, C, H, W] -> [B, N, C*p*p] (Conv2d-unfold channel-major order)
    B, C, H, W = x.shape
    x = x.reshape(B, C, H // p, p, W // p, p)
    x = jnp.transpose(x, (0, 2, 4, 1, 3, 5))  # [B, H/p, W/p, C, p, p]
    return x.reshape(B, (H // p) * (W // p), C * p * p)


def pretrain_vit_forward(params, x, y, patch=8):
    B = x.shape[0]
    patches = patchify(x, patch)                        # [B, N, C*p*p]
    Np = patches.shape[1]
    T = y.shape[1]

    v_out = visual_branch_pallas(
        patches.reshape(B * Np, -1),
        params["patch_w"], params["patch_b"],
        params["vd_w1"], params["vd_b1"], params["vd_w2"], params["vd_b2"])
    t_out = token_branch_pallas(
        y.reshape(B * T),
        params["tok_emb"],
        params["td_w1"], params["td_b1"], params["td_w2"], params["td_b2"])
    return v_out.reshape(B, Np, -1), t_out.reshape(B, T, -1)


def reference_forward(params, x, y, patch=8):
    # Pure-JAX reference using the same bf16-matmul / f32-accumulate recipe.
    bf = jnp.bfloat16
    patches = patchify(x, patch).astype(bf)
    vx = jnp.dot(patches, params["patch_w"].astype(bf),
                 preferred_element_type=jnp.float32) + params["patch_b"]
    vy = jnp.take(params["tok_emb"].astype(bf), y, axis=0).astype(jnp.float32)

    def head(z, w1, b1, w2, b2):
        h = jnp.maximum(
            jnp.dot(z.astype(bf), w1.astype(bf),
                    preferred_element_type=jnp.float32) + b1, 0.0)
        return jnp.dot(h.astype(bf), w2.astype(bf),
                       preferred_element_type=jnp.float32) + b2

    v = jax.nn.sigmoid(head(vx, params["vd_w1"], params["vd_b1"],
                            params["vd_w2"], params["vd_b2"]))
    t = jax.nn.log_softmax(head(vy, params["td_w1"], params["td_b1"],
                                params["td_w2"], params["td_b2"]), axis=-1)
    return v, t


def init_params(key, c, patch, n_dim, dff, v_dim, vocab_size):
    ks = jax.random.split(key, 10)
    patch_dim = c * patch * patch
    s = lambda fan_in: 1.0 / jnp.sqrt(fan_in)
    return {
        "patch_w": jax.random.normal(ks[0], (patch_dim, n_dim)) * s(patch_dim),
        "patch_b": jax.random.normal(ks[1], (n_dim,)) * 0.01,
        "tok_emb": jax.random.normal(ks[2], (vocab_size, n_dim)) * 0.02,
        "vd_w1": jax.random.normal(ks[3], (n_dim, dff)) * s(n_dim),
        "vd_b1": jnp.zeros((dff,)),
        "vd_w2": jax.random.normal(ks[4], (dff, v_dim)) * s(dff),
        "vd_b2": jnp.zeros((v_dim,)),
        "td_w1": jax.random.normal(ks[5], (n_dim, dff)) * s(n_dim),
        "td_b1": jnp.zeros((dff,)),
        "td_w2": jax.random.normal(ks[6], (dff, vocab_size)) * s(dff),
        "td_b2": jnp.zeros((vocab_size,)),
    }


if __name__ == "__main__":
    # Small shapes: batch=2, channels=4, spatial=16, patch=8 -> 4 patches,
    # token seq T=8, n_dim=32, dim_feedforward=64, v_dim=16, vocab_size=24.
    B, C, H, W = 2, 4, 16, 16
    PATCH, N_DIM, DFF, V_DIM, VOCAB, T = 8, 32, 64, 16, 24, 8

    key = jax.random.PRNGKey(0)
    kp, kx, ky = jax.random.split(key, 3)
    params = init_params(kp, C, PATCH, N_DIM, DFF, V_DIM, VOCAB)
    x = jax.random.normal(kx, (B, C, H, W), dtype=jnp.float32)
    y = jax.random.randint(ky, (B, T), 0, VOCAB)

    v_out, t_out = pretrain_vit_forward(params, x, y, patch=PATCH)
    jax.block_until_ready((v_out, t_out))

    v_ref, t_ref = reference_forward(params, x, y, patch=PATCH)
    assert v_out.shape == (B, (H // PATCH) * (W // PATCH), V_DIM)
    assert t_out.shape == (B, T, VOCAB)
    assert jnp.allclose(v_out, v_ref, atol=2e-2, rtol=2e-2), float(
        jnp.max(jnp.abs(v_out - v_ref)))
    assert jnp.allclose(t_out, t_ref, atol=2e-2, rtol=2e-2), float(
        jnp.max(jnp.abs(t_out - t_ref)))

    print("KERNEL_OK")
</pallas_src>

<mosaic_0001>
module attributes {stable_mosaic.version = 11 : i64} {
  func.func @_visual_fused_kernel(%arg0: i32, %arg1: memref<128x256xbf16, #tpu.memory_space<vmem>>, %arg2: memref<256x128xbf16, #tpu.memory_space<vmem>>, %arg3: memref<1x128xf32, #tpu.memory_space<vmem>>, %arg4: memref<128x128xbf16, #tpu.memory_space<vmem>>, %arg5: memref<1x128xf32, #tpu.memory_space<vmem>>, %arg6: memref<128x128xbf16, #tpu.memory_space<vmem>>, %arg7: memref<1x128xf32, #tpu.memory_space<vmem>>, %arg8: memref<128x128xf32, #tpu.memory_space<vmem>>) attributes {dimension_semantics = [#tpu.dimension_semantics<parallel>], iteration_bounds = array<i64: 1>, scalar_prefetch = 0 : i64, scratch_operands = 0 : i64, tpu.core_type = #tpu.core_type<tc>, window_params = [{transform_indices = @transform_0, window_bounds = array<i64: 128, 256>}, {pipeline_mode = #tpu.pipeline_mode<synchronous>, transform_indices = @transform_1, window_bounds = array<i64: 256, 128>}, {pipeline_mode = #tpu.pipeline_mode<synchronous>, transform_indices = @transform_2, window_bounds = array<i64: 1, 128>}, {pipeline_mode = #tpu.pipeline_mode<synchronous>, transform_indices = @transform_3, window_bounds = array<i64: 128, 128>}, {pipeline_mode = #tpu.pipeline_mode<synchronous>, transform_indices = @transform_4, window_bounds = array<i64: 1, 128>}, {pipeline_mode = #tpu.pipeline_mode<synchronous>, transform_indices = @transform_5, window_bounds = array<i64: 128, 128>}, {pipeline_mode = #tpu.pipeline_mode<synchronous>, transform_indices = @transform_6, window_bounds = array<i64: 1, 128>}, {transform_indices = @transform_7, window_bounds = array<i64: 128, 128>}]} {
    %c0 = arith.constant 0 : index
    %c0_0 = arith.constant 0 : index
    %0 = vector.load %arg1[%c0, %c0_0] : memref<128x256xbf16, #tpu.memory_space<vmem>>, vector<128x256xbf16>
    %c0_1 = arith.constant 0 : index
    %c0_2 = arith.constant 0 : index
    %1 = vector.load %arg2[%c0_1, %c0_2] : memref<256x128xbf16, #tpu.memory_space<vmem>>, vector<256x128xbf16>
    %cst = arith.constant dense<0.000000e+00> : vector<128x128xf32>
    %2 = tpu.matmul %0, %1, %cst {dimension_numbers = #tpu.dot_dimension_numbers<[1], [0], [0], [1], [0, 0, 1, 1], [], []>} : vector<128x256xbf16>, vector<256x128xbf16>, vector<128x128xf32> -> vector<128x128xf32>
    %c0_3 = arith.constant 0 : index
    %c0_4 = arith.constant 0 : index
    %3 = vector.load %arg3[%c0_3, %c0_4] : memref<1x128xf32, #tpu.memory_space<vmem>>, vector<1x128xf32>
    %4 = vector.broadcast %3 : vector<1x128xf32> to vector<128x128xf32>
    %5 = arith.addf %2, %4 : vector<128x128xf32>
    %6 = arith.truncf %5 : vector<128x128xf32> to vector<128x128xbf16>
    %c0_5 = arith.constant 0 : index
    %c0_6 = arith.constant 0 : index
    %7 = vector.load %arg4[%c0_5, %c0_6] : memref<128x128xbf16, #tpu.memory_space<vmem>>, vector<128x128xbf16>
    %cst_7 = arith.constant dense<0.000000e+00> : vector<128x128xf32>
    %8 = tpu.matmul %6, %7, %cst_7 {dimension_numbers = #tpu.dot_dimension_numbers<[1], [0], [0], [1], [0, 0, 1, 1], [], []>} : vector<128x128xbf16>, vector<128x128xbf16>, vector<128x128xf32> -> vector<128x128xf32>
    %c0_8 = arith.constant 0 : index
    %c0_9 = arith.constant 0 : index
    %9 = vector.load %arg5[%c0_8, %c0_9] : memref<1x128xf32, #tpu.memory_space<vmem>>, vector<1x128xf32>
    %10 = vector.broadcast %9 : vector<1x128xf32> to vector<128x128xf32>
    %11 = arith.addf %8, %10 : vector<128x128xf32>
    %cst_10 = arith.constant 0.000000e+00 : f32
    %12 = vector.broadcast %cst_10 : f32 to vector<128x128xf32>
    %13 = arith.maximumf %11, %12 : vector<128x128xf32>
    %14 = arith.truncf %13 : vector<128x128xf32> to vector<128x128xbf16>
    %c0_11 = arith.constant 0 : index
    %c0_12 = arith.constant 0 : index
    %15 = vector.load %arg6[%c0_11, %c0_12] : memref<128x128xbf16, #tpu.memory_space<vmem>>, vector<128x128xbf16>
    %cst_13 = arith.constant dense<0.000000e+00> : vector<128x128xf32>
    %16 = tpu.matmul %14, %15, %cst_13 {dimension_numbers = #tpu.dot_dimension_numbers<[1], [0], [0], [1], [0, 0, 1, 1], [], []>} : vector<128x128xbf16>, vector<128x128xbf16>, vector<128x128xf32> -> vector<128x128xf32>
    %c0_14 = arith.constant 0 : index
    %c0_15 = arith.constant 0 : index
    %17 = vector.load %arg7[%c0_14, %c0_15] : memref<1x128xf32, #tpu.memory_space<vmem>>, vector<1x128xf32>
    %18 = vector.broadcast %17 : vector<1x128xf32> to vector<128x128xf32>
    %19 = arith.addf %16, %18 : vector<128x128xf32>
    %cst_16 = arith.constant 0.000000e+00 : f32
    %20 = vector.broadcast %cst_16 : f32 to vector<128x128xf32>
    %21 = arith.subf %20, %19 : vector<128x128xf32>
    %22 = math.exp %21 : vector<128x128xf32>
    %cst_17 = arith.constant 1.000000e+00 : f32
    %23 = vector.broadcast %cst_17 : f32 to vector<128x128xf32>
    %24 = arith.addf %23, %22 : vector<128x128xf32>
    %25 = tpu.reciprocal %24 {approx = true} : vector<128x128xf32> -> vector<128x128xf32>
    %c0_18 = arith.constant 0 : index
    %c0_19 = arith.constant 0 : index
    %26 = vector.load %arg8[%c0_18, %c0_19] : memref<128x128xf32, #tpu.memory_space<vmem>>, vector<128x128xf32>
    tpu.vector_store %arg8[%c0_18, %c0_19], %25 {strides = array<i32>} : memref<128x128xf32, #tpu.memory_space<vmem>>, vector<128x128xf32>,
    return
  }
  func.func @transform_0(%arg0: i32) -> (i32, i32) {
    %c0_i32 = arith.constant 0 : i32
    %c0_i32_0 = arith.constant 0 : i32
    return %arg0, %c0_i32 : i32, i32
  }
  func.func @transform_1(%arg0: i32) -> (i32, i32) {
    %c0_i32 = arith.constant 0 : i32
    %c0_i32_0 = arith.constant 0 : i32
    %c0_i32_1 = arith.constant 0 : i32
    return %c0_i32, %c0_i32_0 : i32, i32
  }
  func.func @transform_2(%arg0: i32) -> (i32, i32) {
    %c0_i32 = arith.constant 0 : i32
    %c0_i32_0 = arith.constant 0 : i32
    %c0_i32_1 = arith.constant 0 : i32
    return %c0_i32, %c0_i32_0 : i32, i32
  }
  func.func @transform_3(%arg0: i32) -> (i32, i32) {
    %c0_i32 = arith.constant 0 : i32
    %c0_i32_0 = arith.constant 0 : i32
    %c0_i32_1 = arith.constant 0 : i32
    return %c0_i32, %c0_i32_0 : i32, i32
  }
  func.func @transform_4(%arg0: i32) -> (i32, i32) {
    %c0_i32 = arith.constant 0 : i32
    %c0_i32_0 = arith.constant 0 : i32
    %c0_i32_1 = arith.constant 0 : i32
    return %c0_i32, %c0_i32_0 : i32, i32
  }
  func.func @transform_5(%arg0: i32) -> (i32, i32) {
    %c0_i32 = arith.constant 0 : i32
    %c0_i32_0 = arith.constant 0 : i32
    %c0_i32_1 = arith.constant 0 : i32
    return %c0_i32, %c0_i32_0 : i32, i32
  }
  func.func @transform_6(%arg0: i32) -> (i32, i32) {
    %c0_i32 = arith.constant 0 : i32
    %c0_i32_0 = arith.constant 0 : i32
    %c0_i32_1 = arith.constant 0 : i32
    return %c0_i32, %c0_i32_0 : i32, i32
  }
  func.func @transform_7(%arg0: i32) -> (i32, i32) {
    %c0_i32 = arith.constant 0 : i32
    %c0_i32_0 = arith.constant 0 : i32
    return %arg0, %c0_i32 : i32, i32
  }
}

</mosaic_0001>

<llo_original>
// kernel: tpu_custom_call.1
$region0: #{tpu_custom_call.1}
  #allocation0 [shape = 'u32[]', space=smem, size = 0x4, offset = 0x4, fixed_abs, tag = 'smem constant byte address 0x4 - core index']
  #allocation1 [shape = 'u32[144,128]{1,0:T(1,128)}', space=vmem, size = 0x12000, scoped, tag = 'internal scratch']
  %s0 = inlined_call_operand.hbm [shape: bf16[128,256], index: 0, kind: input, shape index: {}]
  %s1 = inlined_call_operand.hbm [shape: bf16[256,128], index: 1, kind: input, shape index: {}]
  %s2 = inlined_call_operand.vmem [shape: f32[1,128], index: 2, kind: input, shape index: {}]
  %s3 = inlined_call_operand.hbm [shape: bf16[128,128], index: 3, kind: input, shape index: {}]
  %s4 = inlined_call_operand.vmem [shape: f32[1,128], index: 4, kind: input, shape index: {}]
  %s5 = inlined_call_operand.hbm [shape: bf16[128,128], index: 5, kind: input, shape index: {}]
  %s6 = inlined_call_operand.vmem [shape: f32[1,128], index: 6, kind: input, shape index: {}]
  %s7 = inlined_call_operand.hbm [shape: f32[128,128], index: 7, kind: output, shape index: {}]
  %s8 = sld [smem:[#allocation0]]
  $region54: #{tpu_custom_call.1} parent=0
    _
  %s10 = ssub.s32 1, %s8
  %s11 = scalar_select 0, %s10, %s8
  $region1: #{tpu_custom_call.1} parent=0
    #allocation2 [shape = 'u8[65536]{0}', space=vmem, size = 0x10000, scoped, tag = 'input window, operand 0, single buffered']
    #allocation3 [shape = 's32[1]{0}', space=sflag, size = 0x4, scoped, tag = 'scoped memory for tpu_custom_call.1']
    #allocation4 [shape = 's32[1]{0}', space=sflag, size = 0x4, scoped, tag = 'scoped memory for tpu_custom_call.1']
    #allocation5 [shape = 'u8[65536]{0}', space=vmem, size = 0x10000, scoped, tag = 'input window, operand 1, single buffered']
    #allocation6 [shape = 's32[1]{0}', space=sflag, size = 0x4, scoped, tag = 'scoped memory for tpu_custom_call.1']
    #allocation7 [shape = 'u8[32768]{0}', space=vmem, size = 0x8000, scoped, tag = 'input window, operand 3, single buffered']
    #allocation8 [shape = 'u8[32768]{0}', space=vmem, size = 0x8000, scoped, tag = 'input window, operand 5, single buffered']
    #allocation9 [shape = 's32[1]{0}', space=sflag, size = 0x4, scoped, tag = 'scoped memory for tpu_custom_call.1']
    #allocation10 [shape = 'u8[65536]{0}', space=vmem, size = 0x10000, scoped, tag = 'output window, operand 0, single buffered']
    %12 = vsyncpa [#allocation3], 0
    %13 = vsyncpa [#allocation6], 0
    %14 = vsyncpa [#allocation9], 0
    %15 = vsyncpa [#allocation4], 0
    // Predicated region
    $region2: #{tpu_custom_call.1} parent=1 // pred_check
      _
    $region3: #{tpu_custom_call.1} parent=1 // pred_check_branch
      %17 = sbr.rel (0) target = $region5
    $region4: #{tpu_custom_call.1} parent=1 // pred_region
      %s19 = ssub.s32 2048, 2048
      %20 = vsyncadd [#allocation3], %s19
      %s21 = sshll.u32 [#allocation2], 4
      %s22 = int_to_ptr.vmem [resolvable:$true] %s21
      %27 = dma.hbm_to_vmem [thread:$0]  %s0, 2048, %s22, [#allocation3], 128, 128, 8
    $region5: #{tpu_custom_call.1} parent=1 // pred_fallthru
      _
    // Predicated region
    $region6: #{tpu_custom_call.1} parent=1 // pred_check
      _
    $region7: #{tpu_custom_call.1} parent=1 // pred_check_branch
      %29 = sbr.rel (0) target = $region9
    $region8: #{tpu_custom_call.1} parent=1 // pred_region
      %s31 = ssub.s32 2048, 2048
      %32 = vsyncadd [#allocation6], %s31
      %s33 = sshll.u32 [#allocation5], 4
      %s34 = int_to_ptr.vmem [resolvable:$true] %s33
      %39 = dma.hbm_to_vmem [thread:$0]  %s1, 2048, %s34, [#allocation6], 64, 64, 4
    $region9: #{tpu_custom_call.1} parent=1 // pred_fallthru
      _
    // Predicated region
    $region10: #{tpu_custom_call.1} parent=1 // pred_check
      _
    $region11: #{tpu_custom_call.1} parent=1 // pred_check_branch
      %41 = sbr.rel (0) target = $region13
    $region12: #{tpu_custom_call.1} parent=1 // pred_region
      _
    $region13: #{tpu_custom_call.1} parent=1 // pred_fallthru
      _
    // Predicated region
    $region14: #{tpu_custom_call.1} parent=1 // pred_check
      _
    $region15: #{tpu_custom_call.1} parent=1 // pred_check_branch
      %43 = sbr.rel (0) target = $region17
    $region16: #{tpu_custom_call.1} parent=1 // pred_region
      %s45 = ssub.s32 1024, 1024
      %46 = vsyncadd [#allocation6], %s45
      %s47 = sshll.u32 [#allocation7], 4
      %s48 = int_to_ptr.vmem [resolvable:$true] %s47
      %53 = dma.hbm_to_vmem [thread:$0]  %s3, 1024, %s48, [#allocation6], 64, 64, 4
    $region17: #{tpu_custom_call.1} parent=1 // pred_fallthru
      _
    // Predicated region
    $region18: #{tpu_custom_call.1} parent=1 // pred_check
      _
    $region19: #{tpu_custom_call.1} parent=1 // pred_check_branch
      %55 = sbr.rel (0) target = $region21
    $region20: #{tpu_custom_call.1} parent=1 // pred_region
      _
    $region21: #{tpu_custom_call.1} parent=1 // pred_fallthru
      _
    // Predicated region
    $region22: #{tpu_custom_call.1} parent=1 // pred_check
      _
    $region23: #{tpu_custom_call.1} parent=1 // pred_check_branch
      %57 = sbr.rel (0) target = $region25
    $region24: #{tpu_custom_call.1} parent=1 // pred_region
      %s59 = ssub.s32 1024, 1024
      %60 = vsyncadd [#allocation9], %s59
      %s61 = sshll.u32 [#allocation8], 4
      %s62 = int_to_ptr.vmem [resolvable:$true] %s61
      %67 = dma.hbm_to_vmem [thread:$0]  %s5, 1024, %s62, [#allocation9], 64, 64, 4
    $region25: #{tpu_custom_call.1} parent=1 // pred_fallthru
      _
    // Predicated region
    $region26: #{tpu_custom_call.1} parent=1 // pred_check
      _
    $region27: #{tpu_custom_call.1} parent=1 // pred_check_branch
      %69 = sbr.rel (0) target = $region29
    $region28: #{tpu_custom_call.1} parent=1 // pred_region
      _
    $region29: #{tpu_custom_call.1} parent=1 // pred_fallthru
      _
    // Predicated region
    $region30: #{tpu_custom_call.1} parent=1 // pred_check
      _
    $region31: #{tpu_custom_call.1} parent=1 // pred_check_branch
      %71 = sbr.rel (0) target = $region33
    $region32: #{tpu_custom_call.1} parent=1 // pred_region
      %72 = dma.done [#allocation3], 2048
    $region33: #{tpu_custom_call.1} parent=1 // pred_fallthru
      _
    // Predicated region
    $region34: #{tpu_custom_call.1} parent=1 // pred_check
      _
    $region35: #{tpu_custom_call.1} parent=1 // pred_check_branch
      %74 = sbr.rel (0) target = $region37
    $region36: #{tpu_custom_call.1} parent=1 // pred_region
      %75 = dma.done [#allocation6], 2048
    $region37: #{tpu_custom_call.1} parent=1 // pred_fallthru
      _
    // Predicated region
    $region38: #{tpu_custom_call.1} parent=1 // pred_check
      _
    $region39: #{tpu_custom_call.1} parent=1 // pred_check_branch
      %77 = sbr.rel (0) target = $region41
    $region40: #{tpu_custom_call.1} parent=1 // pred_region
      %78 = dma.done [#allocation6], 1024
    $region41: #{tpu_custom_call.1} parent=1 // pred_fallthru
      _
    // Predicated region
    $region42: #{tpu_custom_call.1} parent=1 // pred_check
      _
    $region43: #{tpu_custom_call.1} parent=1 // pred_check_branch
      %80 = sbr.rel (0) target = $region45
    $region44: #{tpu_custom_call.1} parent=1 // pred_region
      %81 = dma.done [#allocation9], 1024
    $region45: #{tpu_custom_call.1} parent=1 // pred_fallthru
      _
    %v83 = vld [vmem:[#allocation2] sm:$0xff]
    %v84 = vld [vmem:[#allocation2 + $0x8] sm:$0xff]
    %v85 = vld [vmem:[#allocation2 + $0x10] sm:$0xff]
    %v86 = vld [vmem:[#allocation2 + $0x18] sm:$0xff]
    %v87 = vld [vmem:[#allocation2 + $0x20] sm:$0xff]
    %v88 = vld [vmem:[#allocation2 + $0x28] sm:$0xff]
    %v89 = vld [vmem:[#allocation2 + $0x30] sm:$0xff]
    %v90 = vld [vmem:[#allocation2 + $0x38] sm:$0xff]
    %v91 = vld [vmem:[#allocation2 + $0x40] sm:$0xff]
    %v92 = vld [vmem:[#allocation2 + $0x48] sm:$0xff]
    %v93 = vld [vmem:[#allocation2 + $0x50] sm:$0xff]
    %v94 = vld [vmem:[#allocation2 + $0x58] sm:$0xff]
    %v95 = vld [vmem:[#allocation2 + $0x60] sm:$0xff]
    %v96 = vld [vmem:[#allocation2 + $0x68] sm:$0xff]
    %v97 = vld [vmem:[#allocation2 + $0x70] sm:$0xff]
    %v98 = vld [vmem:[#allocation2 + $0x78] sm:$0xff]
    %v99 = vld [vmem:[#allocation5] sm:$0xf]
    %v100 = vld [vmem:[#allocation5 + $0x4] sm:$0xf]
    %v101 = vld [vmem:[#allocation5 + $0x8] sm:$0xf]
    %v102 = vld [vmem:[#allocation5 + $0xc] sm:$0xf]
    %v103 = vld [vmem:[#allocation5 + $0x10] sm:$0xf]
    %v104 = vld [vmem:[#allocation5 + $0x14] sm:$0xf]
    %v105 = vld [vmem:[#allocation5 + $0x18] sm:$0xf]
    %v106 = vld [vmem:[#allocation5 + $0x1c] sm:$0xf]
    %v107 = vld [vmem:[#allocation5 + $0x20] sm:$0xf]
    %v108 = vld [vmem:[#allocation5 + $0x24] sm:$0xf]
    %v109 = vld [vmem:[#allocation5 + $0x28] sm:$0xf]
    %v110 = vld [vmem:[#allocation5 + $0x2c] sm:$0xf]
    %v111 = vld [vmem:[#allocation5 + $0x30] sm:$0xf]
    %v112 = vld [vmem:[#allocation5 + $0x34] sm:$0xf]
    %v113 = vld [vmem:[#allocation5 + $0x38] sm:$0xf]
    %v114 = vld [vmem:[#allocation5 + $0x3c] sm:$0xf]
    %v115 = vld [vmem:[#allocation5 + $0x40] sm:$0xf]
    %v116 = vld [vmem:[#allocation5 + $0x44] sm:$0xf]
    %v117 = vld [vmem:[#allocation5 + $0x48] sm:$0xf]
    %v118 = vld [vmem:[#allocation5 + $0x4c] sm:$0xf]
    %v119 = vld [vmem:[#allocation5 + $0x50] sm:$0xf]
    %v120 = vld [vmem:[#allocation5 + $0x54] sm:$0xf]
    %v121 = vld [vmem:[#allocation5 + $0x58] sm:$0xf]
    %v122 = vld [vmem:[#allocation5 + $0x5c] sm:$0xf]
    %v123 = vld [vmem:[#allocation5 + $0x60] sm:$0xf]
    %v124 = vld [vmem:[#allocation5 + $0x64] sm:$0xf]
    %v125 = vld [vmem:[#allocation5 + $0x68] sm:$0xf]
    %v126 = vld [vmem:[#allocation5 + $0x6c] sm:$0xf]
    %v127 = vld [vmem:[#allocation5 + $0x70] sm:$0xf]
    %v128 = vld [vmem:[#allocation5 + $0x74] sm:$0xf]
    %v129 = vld [vmem:[#allocation5 + $0x78] sm:$0xf]
    %v130 = vld [vmem:[#allocation5 + $0x7c] sm:$0xf]
    %v131 = vld [vmem:[%s2] sm:$0x1]
    %v133 = vlaneseq
    %v134 = vshrl.u32 %v133, 7
    %v135 = vsub.s32 0, %v134
    %v136 = vrot.slane %v131, %v135
    %v154 = vunpack.c.l.b16 %v83
    %v155 = vunpack.c.h.b16 %v83
    %v156 = vunpack.c.l.b16 %v84
    %v157 = vunpack.c.h.b16 %v84
    %v158 = vunpack.c.l.b16 %v85
    %v159 = vunpack.c.h.b16 %v85
    %v160 = vunpack.c.l.b16 %v86
    %v161 = vunpack.c.h.b16 %v86
    %v162 = vunpack.c.l.b16 %v87
    %v163 = vunpack.c.h.b16 %v87
    %v164 = vunpack.c.l.b16 %v88
    %v165 = vunpack.c.h.b16 %v88
    %v166 = vunpack.c.l.b16 %v89
    %v167 = vunpack.c.h.b16 %v89
    %v168 = vunpack.c.l.b16 %v90
    %v169 = vunpack.c.h.b16 %v90
    %v170 = vunpack.c.l.b16 %v91
    %v171 = vunpack.c.h.b16 %v91
    %v172 = vunpack.c.l.b16 %v92
    %v173 = vunpack.c.h.b16 %v92
    %v174 = vunpack.c.l.b16 %v93
    %v175 = vunpack.c.h.b16 %v93
    %v176 = vunpack.c.l.b16 %v94
    %v177 = vunpack.c.h.b16 %v94
    %v178 = vunpack.c.l.b16 %v95
    %v179 = vunpack.c.h.b16 %v95
    %v180 = vunpack.c.l.b16 %v96
    %v181 = vunpack.c.h.b16 %v96
    %v182 = vunpack.c.l.b16 %v97
    %v183 = vunpack.c.h.b16 %v97
    %v184 = vunpack.c.l.b16 %v98
    %v185 = vunpack.c.h.b16 %v98
    %v186 = vpack.c.b16 %v156, %v154
    %v187 = vpack.c.b16 %v157, %v155
    %v188 = vpack.c.b16 %v160, %v158
    %v189 = vpack.c.b16 %v161, %v159
    %v190 = vpack.c.b16 %v164, %v162
    %v191 = vpack.c.b16 %v165, %v163
    %v192 = vpack.c.b16 %v168, %v166
    %v193 = vpack.c.b16 %v169, %v167
    %v194 = vpack.c.b16 %v172, %v170
    %v195 = vpack.c.b16 %v173, %v171
    %v196 = vpack.c.b16 %v176, %v174
    %v197 = vpack.c.b16 %v177, %v175
    %v198 = vpack.c.b16 %v180, %v178
    %v199 = vpack.c.b16 %v181, %v179
    %v200 = vpack.c.b16 %v184, %v182
    %v201 = vpack.c.b16 %v185, %v183
    %v250 = vunpack.c.l.b16 %v99
    %v251 = vunpack.c.l.b16 %v100
    %v252 = vunpack.c.l.b16 %v101
    %v253 = vunpack.c.l.b16 %v102
    %v254 = vunpack.c.l.b16 %v103
    %v255 = vunpack.c.l.b16 %v104
    %v256 = vunpack.c.l.b16 %v105
    %v257 = vunpack.c.l.b16 %v106
    %v258 = vunpack.c.l.b16 %v107
    %v259 = vunpack.c.l.b16 %v108
    %v260 = vunpack.c.l.b16 %v109
    %v261 = vunpack.c.l.b16 %v110
    %v262 = vunpack.c.l.b16 %v111
    %v263 = vunpack.c.l.b16 %v112
    %v264 = vunpack.c.l.b16 %v113
    %v265 = vunpack.c.l.b16 %v114
    %v266 = vunpack.c.l.b16 %v115
    %v267 = vunpack.c.l.b16 %v116
    %v268 = vunpack.c.l.b16 %v117
    %v269 = vunpack.c.l.b16 %v118
    %v270 = vunpack.c.l.b16 %v119
    %v271 = vunpack.c.l.b16 %v120
    %v272 = vunpack.c.l.b16 %v121
    %v273 = vunpack.c.l.b16 %v122
    %v274 = vunpack.c.l.b16 %v123
    %v275 = vunpack.c.l.b16 %v124
    %v276 = vunpack.c.l.b16 %v125
    %v277 = vunpack.c.l.b16 %v126
    %v278 = vunpack.c.l.b16 %v127
    %v279 = vunpack.c.l.b16 %v128
    %v280 = vunpack.c.l.b16 %v129
    %v281 = vunpack.c.l.b16 %v130
    %v282 = vpack.c.b16 %v251, %v250
    %v283 = vpack.c.b16 %v253, %v252
    %v284 = vpack.c.b16 %v255, %v254
    %v285 = vpack.c.b16 %v257, %v256
    %v286 = vpack.c.b16 %v259, %v258
    %v287 = vpack.c.b16 %v261, %v260
    %v288 = vpack.c.b16 %v263, %v262
    %v289 = vpack.c.b16 %v265, %v264
    %v290 = vpack.c.b16 %v267, %v266
    %v291 = vpack.c.b16 %v269, %v268
    %v292 = vpack.c.b16 %v271, %v270
    %v293 = vpack.c.b16 %v273, %v272
    %v294 = vpack.c.b16 %v275, %v274
    %v295 = vpack.c.b16 %v277, %v276
    %v296 = vpack.c.b16 %v279, %v278
    %v297 = vpack.c.b16 %v281, %v280
    %314 = vmatprep.subr.bf16.mxu0 0
    %315 = vmatpush1.bf16.msra.mxu0 %v282
    %316 = vmatprep.subr.bf16.mxu0 0
    %317 = vmatpush1.bf16.msra.mxu0 %v283
    %318 = vmatprep.subr.bf16.mxu0 0
    %319 = vmatpush1.bf16.msra.mxu0 %v284
    %320 = vmatprep.subr.bf16.mxu0 0
    %321 = vmatpush1.bf16.msra.mxu0 %v285
    %322 = vmatprep.subr.bf16.mxu0 0
    %323 = vmatpush1.bf16.msra.mxu0 %v286
    %324 = vmatprep.subr.bf16.mxu0 0
    %325 = vmatpush1.bf16.msra.mxu0 %v287
    %326 = vmatprep.subr.bf16.mxu0 0
    %327 = vmatpush1.bf16.msra.mxu0 %v288
    %328 = vmatprep.subr.bf16.mxu0 0
    %329 = vmatpush1.bf16.msra.mxu0 %v289
    %330 = vmatprep.subr.bf16.mxu0 0
    %331 = vmatpush1.bf16.msra.mxu0 %v290
    %332 = vmatprep.subr.bf16.mxu0 0
    %333 = vmatpush1.bf16.msra.mxu0 %v291
    %334 = vmatprep.subr.bf16.mxu0 0
    %335 = vmatpush1.bf16.msra.mxu0 %v292
    %336 = vmatprep.subr.bf16.mxu0 0
    %337 = vmatpush1.bf16.msra.mxu0 %v293
    %338 = vmatprep.subr.bf16.mxu0 0
    %339 = vmatpush1.bf16.msra.mxu0 %v294
    %340 = vmatprep.subr.bf16.mxu0 0
    %341 = vmatpush1.bf16.msra.mxu0 %v295
    %342 = vmatprep.subr.bf16.mxu0 0
    %343 = vmatpush1.bf16.msra.mxu0 %v296
    %344 = vmatprep.subr.bf16.mxu0 0
    %345 = vmatpush1.bf16.msra.mxu0 %v297
    %346 = vmatprep.mubr.bf16.mxu0 %v187
    %347 = vmatmul.mubr.bf16.gmra.mrb[0].mxu0 %v186
    %v348 = vpop.f32.mrb[0].mxu0
    %v349 = vadd.f32 %v136, %v348
    %v350 = vpop.f32.mrb[0].mxu0
    %v351 = vpop.f32.mrb[0].mxu0
    %v352 = vadd.f32 %v136, %v351
    %v353 = vpop.f32.mrb[0].mxu0
    %354 = vmatprep.mubr.bf16.mxu0 %v189
    %355 = vmatmul.mubr.bf16.gmra.mrb[0].mxu0 %v188
    %v356 = vpop.f32.mrb[0].mxu0
    %v357 = vadd.f32 %v136, %v356
    %v358 = vpop.f32.mrb[0].mxu0
    %v359 = vpop.f32.mrb[0].mxu0
    %v360 = vadd.f32 %v136, %v359
    %v361 = vpop.f32.mrb[0].mxu0
    %362 = vmatprep.mubr.bf16.mxu0 %v191
    %363 = vmatmul.mubr.bf16.gmra.mrb[0].mxu0 %v190
    %v364 = vpop.f32.mrb[0].mxu0
    %v365 = vadd.f32 %v136, %v364
    %v366 = vpop.f32.mrb[0].mxu0
    %v367 = vpop.f32.mrb[0].mxu0
    %v368 = vadd.f32 %v136, %v367
    %v369 = vpop.f32.mrb[0].mxu0
    %370 = vmatprep.mubr.bf16.mxu0 %v193
    %371 = vmatmul.mubr.bf16.gmra.mrb[0].mxu0 %v192
    %v372 = vpop.f32.mrb[0].mxu0
    %v373 = vadd.f32 %v136, %v372
    %v374 = vpop.f32.mrb[0].mxu0
    %v375 = vpop.f32.mrb[0].mxu0
    %v376 = vadd.f32 %v136, %v375
    %v377 = vpop.f32.mrb[0].mxu0
    %378 = vmatprep.mubr.bf16.mxu0 %v195
    %379 = vmatmul.mubr.bf16.gmra.mrb[0].mxu0 %v194
    %v380 = vpop.f32.mrb[0].mxu0
    %v381 = vadd.f32 %v136, %v380
    %v382 = vpop.f32.mrb[0].mxu0
    %v383 = vpop.f32.mrb[0].mxu0
    %v384 = vadd.f32 %v136, %v383
    %v385 = vpop.f32.mrb[0].mxu0
    %386 = vmatprep.mubr.bf16.mxu0 %v197
    %387 = vmatmul.mubr.bf16.gmra.mrb[0].mxu0 %v196
    %v388 = vpop.f32.mrb[0].mxu0
    %v389 = vadd.f32 %v136, %v388
    %v390 = vpop.f32.mrb[0].mxu0
    %v391 = vpop.f32.mrb[0].mxu0
    %v392 = vadd.f32 %v136, %v391
    %v393 = vpop.f32.mrb[0].mxu0
    %394 = vmatprep.mubr.bf16.mxu0 %v199
    %395 = vmatmul.mubr.bf16.gmra.mrb[0].mxu0 %v198
    %v396 = vpop.f32.mrb[0].mxu0
    %v397 = vadd.f32 %v136, %v396
    %v398 = vpop.f32.mrb[0].mxu0
    %v399 = vpop.f32.mrb[0].mxu0
    %v400 = vadd.f32 %v136, %v399
    %v401 = vpop.f32.mrb[0].mxu0
    %402 = vmatprep.mubr.bf16.mxu0 %v201
    %403 = vmatmul.mubr.bf16.gmra.mrb[0].mxu0 %v200
    %v404 = vpop.f32.mrb[0].mxu0
    %v405 = vadd.f32 %v136, %v404
    %v406 = vpop.f32.mrb[0].mxu0
    %v407 = vpop.f32.mrb[0].mxu0
    %v408 = vadd.f32 %v136, %v407
    %v409 = vpop.f32.mrb[0].mxu0
    %410 = vdwg.mxu0
    %v411 = vpack.c.bf16 %v352, %v349
    %v412 = vpack.c.bf16 %v360, %v357
    %v413 = vpack.c.bf16 %v368, %v365
    %v414 = vpack.c.bf16 %v376, %v373
    %v415 = vpack.c.bf16 %v384, %v381
    %v416 = vpack.c.bf16 %v392, %v389
    %v417 = vpack.c.bf16 %v400, %v397
    %v418 = vpack.c.bf16 %v408, %v405
    %v419 = vld [vmem:[#allocation7] sm:$0xf]
    %v420 = vld [vmem:[#allocation7 + $0x4] sm:$0xf]
    %v421 = vld [vmem:[#allocation7 + $0x8] sm:$0xf]
    %v422 = vld [vmem:[#allocation7 + $0xc] sm:$0xf]
    %v423 = vld [vmem:[#allocation7 + $0x10] sm:$0xf]
    %v424 = vld [vmem:[#allocation7 + $0x14] sm:$0xf]
    %v425 = vld [vmem:[#allocation7 + $0x18] sm:$0xf]
    %v426 = vld [vmem:[#allocation7 + $0x1c] sm:$0xf]
    %v427 = vld [vmem:[#allocation7 + $0x20] sm:$0xf]
    %v428 = vld [vmem:[#allocation7 + $0x24] sm:$0xf]
    %v429 = vld [vmem:[#allocation7 + $0x28] sm:$0xf]
    %v430 = vld [vmem:[#allocation7 + $0x2c] sm:$0xf]
    %v431 = vld [vmem:[#allocation7 + $0x30] sm:$0xf]
    %v432 = vld [vmem:[#allocation7 + $0x34] sm:$0xf]
    %v433 = vld [vmem:[#allocation7 + $0x38] sm:$0xf]
    %v434 = vld [vmem:[#allocation7 + $0x3c] sm:$0xf]
    %v435 = vld [vmem:[%s4] sm:$0x1]
    %v437 = vlaneseq
    %v438 = vshrl.u32 %v437, 7
    %v439 = vsub.s32 0, %v438
    %v440 = vrot.slane %v435, %v439
    %v458 = vunpack.c.l.b16 %v419
    %v459 = vunpack.c.l.b16 %v420
    %v460 = vunpack.c.l.b16 %v421
    %v461 = vunpack.c.l.b16 %v422
    %v462 = vunpack.c.l.b16 %v423
    %v463 = vunpack.c.l.b16 %v424
    %v464 = vunpack.c.l.b16 %v425
    %v465 = vunpack.c.l.b16 %v426
    %v466 = vunpack.c.l.b16 %v427
    %v467 = vunpack.c.l.b16 %v428
    %v468 = vunpack.c.l.b16 %v429
    %v469 = vunpack.c.l.b16 %v430
    %v470 = vunpack.c.l.b16 %v431
    %v471 = vunpack.c.l.b16 %v432
    %v472 = vunpack.c.l.b16 %v433
    %v473 = vunpack.c.l.b16 %v434
    %v474 = vpack.c.b16 %v459, %v458
    %v475 = vpack.c.b16 %v461, %v460
    %v476 = vpack.c.b16 %v463, %v462
    %v477 = vpack.c.b16 %v465, %v464
    %v478 = vpack.c.b16 %v467, %v466
    %v479 = vpack.c.b16 %v469, %v468
    %v480 = vpack.c.b16 %v471, %v470
    %v481 = vpack.c.b16 %v473, %v472
    %490 = vmatprep.subr.bf16.mxu0 0
    %491 = vmatpush1.bf16.msra.mxu0 %v474
    %492 = vmatprep.subr.bf16.mxu0 0
    %493 = vmatpush1.bf16.msra.mxu0 %v475
    %494 = vmatprep.subr.bf16.mxu0 0
    %495 = vmatpush1.bf16.msra.mxu0 %v476
    %496 = vmatprep.subr.bf16.mxu0 0
    %497 = vmatpush1.bf16.msra.mxu0 %v477
    %498 = vmatprep.subr.bf16.mxu0 0
    %499 = vmatpush1.bf16.msra.mxu0 %v478
    %500 = vmatprep.subr.bf16.mxu0 0
    %501 = vmatpush1.bf16.msra.mxu0 %v479
    %502 = vmatprep.subr.bf16.mxu0 0
    %503 = vmatpush1.bf16.msra.mxu0 %v480
    %504 = vmatprep.subr.bf16.mxu0 0
    %505 = vmatpush1.bf16.msra.mxu0 %v481
    %506 = vmatprep.subr.bf16.mxu0 0
    %507 = vmatpush1.bf16.msra.mxu0 0
    %508 = vmatprep.subr.bf16.mxu0 0
    %509 = vmatpush1.bf16.msra.mxu0 0
    %510 = vmatprep.subr.bf16.mxu0 0
    %511 = vmatpush1.bf16.msra.mxu0 0
    %512 = vmatprep.subr.bf16.mxu0 0
    %513 = vmatpush1.bf16.msra.mxu0 0
    %514 = vmatprep.subr.bf16.mxu0 0
    %515 = vmatpush1.bf16.msra.mxu0 0
    %516 = vmatprep.subr.bf16.mxu0 0
    %517 = vmatpush1.bf16.msra.mxu0 0
    %518 = vmatprep.subr.bf16.mxu0 0
    %519 = vmatpush1.bf16.msra.mxu0 0
    %520 = vmatprep.subr.bf16.mxu0 0
    %521 = vmatpush1.bf16.msra.mxu0 0
    %522 = vmatprep.mubr.bf16.mxu0 0
    %523 = vmatmul.mubr.bf16.gmra.mrb[0].mxu0 %v411
    %v524 = vpop.f32.mrb[0].mxu0
    %v525 = vadd.f32 %v440, %v524
    %v526 = vpop.f32.mrb[0].mxu0
    %v527 = vpop.f32.mrb[0].mxu0
    %v528 = vadd.f32 %v440, %v527
    %v529 = vpop.f32.mrb[0].mxu0
    %530 = vmatprep.mubr.bf16.mxu0 0
    %531 = vmatmul.mubr.bf16.gmra.mrb[0].mxu0 %v412
    %v532 = vpop.f32.mrb[0].mxu0
    %v533 = vadd.f32 %v440, %v532
    %v534 = vpop.f32.mrb[0].mxu0
    %v535 = vpop.f32.mrb[0].mxu0
    %v536 = vadd.f32 %v440, %v535
    %v537 = vpop.f32.mrb[0].mxu0
    %538 = vmatprep.mubr.bf16.mxu0 0
    %539 = vmatmul.mubr.bf16.gmra.mrb[0].mxu0 %v413
    %v540 = vpop.f32.mrb[0].mxu0
    %v541 = vadd.f32 %v440, %v540
    %v542 = vpop.f32.mrb[0].mxu0
    %v543 = vpop.f32.mrb[0].mxu0
    %v544 = vadd.f32 %v440, %v543
    %v545 = vpop.f32.mrb[0].mxu0
    %546 = vmatprep.mubr.bf16.mxu0 0
    %547 = vmatmul.mubr.bf16.gmra.mrb[0].mxu0 %v414
    %v548 = vpop.f32.mrb[0].mxu0
    %v549 = vadd.f32 %v440, %v548
    %v550 = vpop.f32.mrb[0].mxu0
    %v551 = vpop.f32.mrb[0].mxu0
    %v552 = vadd.f32 %v440, %v551
    %v553 = vpop.f32.mrb[0].mxu0
    %554 = vmatprep.mubr.bf16.mxu0 0
    %555 = vmatmul.mubr.bf16.gmra.mrb[0].mxu0 %v415
    %v556 = vpop.f32.mrb[0].mxu0
    %v557 = vadd.f32 %v440, %v556
    %v558 = vpop.f32.mrb[0].mxu0
    %v559 = vpop.f32.mrb[0].mxu0
    %v560 = vadd.f32 %v440, %v559
    %v561 = vpop.f32.mrb[0].mxu0
    %562 = vmatprep.mubr.bf16.mxu0 0
    %563 = vmatmul.mubr.bf16.gmra.mrb[0].mxu0 %v416
    %v564 = vpop.f32.mrb[0].mxu0
    %v565 = vadd.f32 %v440, %v564
    %v566 = vpop.f32.mrb[0].mxu0
    %v567 = vpop.f32.mrb[0].mxu0
    %v568 = vadd.f32 %v440, %v567
    %v569 = vpop.f32.mrb[0].mxu0
    %570 = vmatprep.mubr.bf16.mxu0 0
    %571 = vmatmul.mubr.bf16.gmra.mrb[0].mxu0 %v417
    %v572 = vpop.f32.mrb[0].mxu0
    %v573 = vadd.f32 %v440, %v572
    %v574 = vpop.f32.mrb[0].mxu0
    %v575 = vpop.f32.mrb[0].mxu0
    %v576 = vadd.f32 %v440, %v575
    %v577 = vpop.f32.mrb[0].mxu0
    %578 = vmatprep.mubr.bf16.mxu0 0
    %579 = vmatmul.mubr.bf16.gmra.mrb[0].mxu0 %v418
    %v580 = vpop.f32.mrb[0].mxu0
    %v581 = vadd.f32 %v440, %v580
    %v582 = vpop.f32.mrb[0].mxu0
    %v583 = vpop.f32.mrb[0].mxu0
    %v584 = vadd.f32 %v440, %v583
    %v585 = vpop.f32.mrb[0].mxu0
    %586 = vdwg.mxu0
    %v587 = vmax.f32 %v525, 0.0
    %v588 = vmax.f32 %v528, 0.0
    %v589 = vmax.f32 %v533, 0.0
    %v590 = vmax.f32 %v536, 0.0
    %v591 = vmax.f32 %v541, 0.0
    %v592 = vmax.f32 %v544, 0.0
    %v593 = vmax.f32 %v549, 0.0
    %v594 = vmax.f32 %v552, 0.0
    %v595 = vmax.f32 %v557, 0.0
    %v596 = vmax.f32 %v560, 0.0
    %v597 = vmax.f32 %v565, 0.0
    %v598 = vmax.f32 %v568, 0.0
    %v599 = vmax.f32 %v573, 0.0
    %v600 = vmax.f32 %v576, 0.0
    %v601 = vmax.f32 %v581, 0.0
    %v602 = vmax.f32 %v584, 0.0
    %v603 = vpack.c.bf16 %v588, %v587
    %v604 = vpack.c.bf16 %v590, %v589
    %v605 = vpack.c.bf16 %v592, %v591
    %v606 = vpack.c.bf16 %v594, %v593
    %v607 = vpack.c.bf16 %v596, %v595
    %v608 = vpack.c.bf16 %v598, %v597
    %v609 = vpack.c.bf16 %v600, %v599
    %v610 = vpack.c.bf16 %v602, %v601
    %v611 = vld [vmem:[#allocation8] sm:$0xf]
    %v612 = vld [vmem:[#allocation8 + $0x4] sm:$0xf]
    %v613 = vld [vmem:[#allocation8 + $0x8] sm:$0xf]
    %v614 = vld [vmem:[#allocation8 + $0xc] sm:$0xf]
    %v615 = vld [vmem:[#allocation8 + $0x10] sm:$0xf]
    %v616 = vld [vmem:[#allocation8 + $0x14] sm:$0xf]
    %v617 = vld [vmem:[#allocation8 + $0x18] sm:$0xf]
    %v618 = vld [vmem:[#allocation8 + $0x1c] sm:$0xf]
    %v619 = vld [vmem:[#allocation8 + $0x20] sm:$0xf]
    %v620 = vld [vmem:[#allocation8 + $0x24] sm:$0xf]
    %v621 = vld [vmem:[#allocation8 + $0x28] sm:$0xf]
    %v622 = vld [vmem:[#allocation8 + $0x2c] sm:$0xf]
    %v623 = vld [vmem:[#allocation8 + $0x30] sm:$0xf]
    %v624 = vld [vmem:[#allocation8 + $0x34] sm:$0xf]
    %v625 = vld [vmem:[#allocation8 + $0x38] sm:$0xf]
    %v626 = vld [vmem:[#allocation8 + $0x3c] sm:$0xf]
    %v627 = vld [vmem:[%s6] sm:$0x1]
    %v629 = vlaneseq
    %v630 = vshrl.u32 %v629, 7
    %v631 = vsub.s32 0, %v630
    %v632 = vrot.slane %v627, %v631
    %v650 = vunpack.c.l.b16 %v611
    %v651 = vunpack.c.l.b16 %v612
    %v652 = vunpack.c.l.b16 %v613
    %v653 = vunpack.c.l.b16 %v614
    %v654 = vunpack.c.l.b16 %v615
    %v655 = vunpack.c.l.b16 %v616
    %v656 = vunpack.c.l.b16 %v617
    %v657 = vunpack.c.l.b16 %v618
    %v658 = vunpack.c.l.b16 %v619
    %v659 = vunpack.c.l.b16 %v620
    %v660 = vunpack.c.l.b16 %v621
    %v661 = vunpack.c.l.b16 %v622
    %v662 = vunpack.c.l.b16 %v623
    %v663 = vunpack.c.l.b16 %v624
    %v664 = vunpack.c.l.b16 %v625
    %v665 = vunpack.c.l.b16 %v626
    %v666 = vpack.c.b16 %v651, %v650
    %v667 = vpack.c.b16 %v653, %v652
    %v668 = vpack.c.b16 %v655, %v654
    %v669 = vpack.c.b16 %v657, %v656
    %v670 = vpack.c.b16 %v659, %v658
    %v671 = vpack.c.b16 %v661, %v660
    %v672 = vpack.c.b16 %v663, %v662
    %v673 = vpack.c.b16 %v665, %v664
    %682 = vmatprep.subr.bf16.mxu0 0
    %683 = vmatpush1.bf16.msra.mxu0 %v666
    %684 = vmatprep.subr.bf16.mxu0 0
    %685 = vmatpush1.bf16.msra.mxu0 %v667
    %686 = vmatprep.subr.bf16.mxu0 0
    %687 = vmatpush1.bf16.msra.mxu0 %v668
    %688 = vmatprep.subr.bf16.mxu0 0
    %689 = vmatpush1.bf16.msra.mxu0 %v669
    %690 = vmatprep.subr.bf16.mxu0 0
    %691 = vmatpush1.bf16.msra.mxu0 %v670
    %692 = vmatprep.subr.bf16.mxu0 0
    %693 = vmatpush1.bf16.msra.mxu0 %v671
    %694 = vmatprep.subr.bf16.mxu0 0
    %695 = vmatpush1.bf16.msra.mxu0 %v672
    %696 = vmatprep.subr.bf16.mxu0 0
    %697 = vmatpush1.bf16.msra.mxu0 %v673
    %698 = vmatprep.subr.bf16.mxu0 0
    %699 = vmatpush1.bf16.msra.mxu0 0
    %700 = vmatprep.subr.bf16.mxu0 0
    %701 = vmatpush1.bf16.msra.mxu0 0
    %702 = vmatprep.subr.bf16.mxu0 0
    %703 = vmatpush1.bf16.msra.mxu0 0
    %704 = vmatprep.subr.bf16.mxu0 0
    %705 = vmatpush1.bf16.msra.mxu0 0
    %706 = vmatprep.subr.bf16.mxu0 0
    %707 = vmatpush1.bf16.msra.mxu0 0
    %708 = vmatprep.subr.bf16.mxu0 0
    %709 = vmatpush1.bf16.msra.mxu0 0
    %710 = vmatprep.subr.bf16.mxu0 0
    %711 = vmatpush1.bf16.msra.mxu0 0
    %712 = vmatprep.subr.bf16.mxu0 0
    %713 = vmatpush1.bf16.msra.mxu0 0
    %714 = vmatprep.mubr.bf16.mxu0 0
    %715 = vmatmul.mubr.bf16.gmra.mrb[0].mxu0 %v603
    %v716 = vpop.f32.mrb[0].mxu0
    %v717 = vadd.f32 %v632, %v716
    %v718 = vpop.f32.mrb[0].mxu0
    %v719 = vpop.f32.mrb[0].mxu0
    %v720 = vadd.f32 %v632, %v719
    %v721 = vpop.f32.mrb[0].mxu0
    %722 = vmatprep.mubr.bf16.mxu0 0
    %723 = vmatmul.mubr.bf16.gmra.mrb[0].mxu0 %v604
    %v724 = vpop.f32.mrb[0].mxu0
    %v725 = vadd.f32 %v632, %v724
    %v726 = vpop.f32.mrb[0].mxu0
    %v727 = vpop.f32.mrb[0].mxu0
    %v728 = vadd.f32 %v632, %v727
    %v729 = vpop.f32.mrb[0].mxu0
    %730 = vmatprep.mubr.bf16.mxu0 0
    %731 = vmatmul.mubr.bf16.gmra.mrb[0].mxu0 %v605
    %v732 = vpop.f32.mrb[0].mxu0
    %v733 = vadd.f32 %v632, %v732
    %v734 = vpop.f32.mrb[0].mxu0
    %v735 = vpop.f32.mrb[0].mxu0
    %v736 = vadd.f32 %v632, %v735
    %v737 = vpop.f32.mrb[0].mxu0
    %738 = vmatprep.mubr.bf16.mxu0 0
    %739 = vmatmul.mubr.bf16.gmra.mrb[0].mxu0 %v606
    %v740 = vpop.f32.mrb[0].mxu0
    %v741 = vadd.f32 %v632, %v740
    %v742 = vpop.f32.mrb[0].mxu0
    %v743 = vpop.f32.mrb[0].mxu0
    %v744 = vadd.f32 %v632, %v743
    %v745 = vpop.f32.mrb[0].mxu0
    %746 = vmatprep.mubr.bf16.mxu0 0
    %747 = vmatmul.mubr.bf16.gmra.mrb[0].mxu0 %v607
    %v748 = vpop.f32.mrb[0].mxu0
    %v749 = vadd.f32 %v632, %v748
    %v750 = vpop.f32.mrb[0].mxu0
    %v751 = vpop.f32.mrb[0].mxu0
    %v752 = vadd.f32 %v632, %v751
    %v753 = vpop.f32.mrb[0].mxu0
    %754 = vmatprep.mubr.bf16.mxu0 0
    %755 = vmatmul.mubr.bf16.gmra.mrb[0].mxu0 %v608
    %v756 = vpop.f32.mrb[0].mxu0
    %v757 = vadd.f32 %v632, %v756
    %v758 = vpop.f32.mrb[0].mxu0
    %v759 = vpop.f32.mrb[0].mxu0
    %v760 = vadd.f32 %v632, %v759
    %v761 = vpop.f32.mrb[0].mxu0
    %762 = vmatprep.mubr.bf16.mxu0 0
    %763 = vmatmul.mubr.bf16.gmra.mrb[0].mxu0 %v609
    %v764 = vpop.f32.mrb[0].mxu0
    %v765 = vadd.f32 %v632, %v764
    %v766 = vpop.f32.mrb[0].mxu0
    %v767 = vpop.f32.mrb[0].mxu0
    %v768 = vadd.f32 %v632, %v767
    %v769 = vpop.f32.mrb[0].mxu0
    %770 = vmatprep.mubr.bf16.mxu0 0
    %771 = vmatmul.mubr.bf16.gmra.mrb[0].mxu0 %v610
    %v772 = vpop.f32.mrb[0].mxu0
    %v773 = vadd.f32 %v632, %v772
    %v774 = vpop.f32.mrb[0].mxu0
    %v775 = vpop.f32.mrb[0].mxu0
    %v776 = vadd.f32 %v632, %v775
    %v777 = vpop.f32.mrb[0].mxu0
    %778 = vdwg.mxu0
    %v779 = vsub.f32 0.0, %v717
    %v780 = vsub.f32 0.0, %v720
    %v781 = vsub.f32 0.0, %v725
    %v782 = vsub.f32 0.0, %v728
    %v783 = vsub.f32 0.0, %v733
    %v784 = vsub.f32 0.0, %v736
    %v785 = vsub.f32 0.0, %v741
    %v786 = vsub.f32 0.0, %v744
    %v787 = vsub.f32 0.0, %v749
    %v788 = vsub.f32 0.0, %v752
    %v789 = vsub.f32 0.0, %v757
    %v790 = vsub.f32 0.0, %v760
    %v791 = vsub.f32 0.0, %v765
    %v792 = vsub.f32 0.0, %v768
    %v793 = vsub.f32 0.0, %v773
    %v794 = vsub.f32 0.0, %v776
    %v795 = vmul.f32 %v779, 1.442695
    %v796 = vpow.pop %v795
    %v797 = vmul.f32 %v780, 1.442695
    %v798 = vpow.pop %v797
    %v799 = vmul.f32 %v781, 1.442695
    %v800 = vpow.pop %v799
    %v801 = vmul.f32 %v782, 1.442695
    %v802 = vpow.pop %v801
    %v803 = vmul.f32 %v783, 1.442695
    %v804 = vpow.pop %v803
    %v805 = vmul.f32 %v784, 1.442695
    %v806 = vpow.pop %v805
    %v807 = vmul.f32 %v785, 1.442695
    %v808 = vpow.pop %v807
    %v809 = vmul.f32 %v786, 1.442695
    %v810 = vpow.pop %v809
    %v811 = vmul.f32 %v787, 1.442695
    %v812 = vpow.pop %v811
    %v813 = vmul.f32 %v788, 1.442695
    %v814 = vpow.pop %v813
    %v815 = vmul.f32 %v789, 1.442695
    %v816 = vpow.pop %v815
    %v817 = vmul.f32 %v790, 1.442695
    %v818 = vpow.pop %v817
    %v819 = vmul.f32 %v791, 1.442695
    %v820 = vpow.pop %v819
    %v821 = vmul.f32 %v792, 1.442695
    %v822 = vpow.pop %v821
    %v823 = vmul.f32 %v793, 1.442695
    %v824 = vpow.pop %v823
    %v825 = vmul.f32 %v794, 1.442695
    %v826 = vpow.pop %v825
    %v827 = vadd.f32 %v796, 1.0
    %v828 = vadd.f32 %v798, 1.0
    %v829 = vadd.f32 %v800, 1.0
    %v830 = vadd.f32 %v802, 1.0
    %v831 = vadd.f32 %v804, 1.0
    %v832 = vadd.f32 %v806, 1.0
    %v833 = vadd.f32 %v808, 1.0
    %v834 = vadd.f32 %v810, 1.0
    %v835 = vadd.f32 %v812, 1.0
    %v836 = vadd.f32 %v814, 1.0
    %v837 = vadd.f32 %v816, 1.0
    %v838 = vadd.f32 %v818, 1.0
    %v839 = vadd.f32 %v820, 1.0
    %v840 = vadd.f32 %v822, 1.0
    %v841 = vadd.f32 %v824, 1.0
    %v842 = vadd.f32 %v826, 1.0
    %v843 = vrcp.pop %v827
    %v844 = vrcp.pop %v828
    %v845 = vrcp.pop %v829
    %v846 = vrcp.pop %v830
    %v847 = vrcp.pop %v831
    %v848 = vrcp.pop %v832
    %v849 = vrcp.pop %v833
    %v850 = vrcp.pop %v834
    %v851 = vrcp.pop %v835
    %v852 = vrcp.pop %v836
    %v853 = vrcp.pop %v837
    %v854 = vrcp.pop %v838
    %v855 = vrcp.pop %v839
    %v856 = vrcp.pop %v840
    %v857 = vrcp.pop %v841
    %v858 = vrcp.pop %v842
    %859 = vst [vmem:[#allocation10] sm:$0xff] %v843
    %860 = vst [vmem:[#allocation10 + $0x8] sm:$0xff] %v844
    %861 = vst [vmem:[#allocation10 + $0x10] sm:$0xff] %v845
    %862 = vst [vmem:[#allocation10 + $0x18] sm:$0xff] %v846
    %863 = vst [vmem:[#allocation10 + $0x20] sm:$0xff] %v847
    %864 = vst [vmem:[#allocation10 + $0x28] sm:$0xff] %v848
    %865 = vst [vmem:[#allocation10 + $0x30] sm:$0xff] %v849
    %866 = vst [vmem:[#allocation10 + $0x38] sm:$0xff] %v850
    %867 = vst [vmem:[#allocation10 + $0x40] sm:$0xff] %v851
    %868 = vst [vmem:[#allocation10 + $0x48] sm:$0xff] %v852
    %869 = vst [vmem:[#allocation10 + $0x50] sm:$0xff] %v853
    %870 = vst [vmem:[#allocation10 + $0x58] sm:$0xff] %v854
    %871 = vst [vmem:[#allocation10 + $0x60] sm:$0xff] %v855
    %872 = vst [vmem:[#allocation10 + $0x68] sm:$0xff] %v856
    %873 = vst [vmem:[#allocation10 + $0x70] sm:$0xff] %v857
    %874 = vst [vmem:[#allocation10 + $0x78] sm:$0xff] %v858
    // Predicated region
    $region46: #{tpu_custom_call.1} parent=1 // pred_check
      _
    $region47: #{tpu_custom_call.1} parent=1 // pred_check_branch
      %876 = sbr.rel (0) target = $region49
    $region48: #{tpu_custom_call.1} parent=1 // pred_region
      %s878 = ssub.s32 2048, 2048
      %879 = vsyncadd [#allocation4], %s878
      %s880 = sshll.u32 [#allocation10], 4
      %s881 = int_to_ptr.vmem [resolvable:$true] %s880
      %886 = dma.vmem_to_hbm [thread:$0]  %s881, 2048, %s7, [#allocation4], 128, 128, 8
    $region49: #{tpu_custom_call.1} parent=1 // pred_fallthru
      _
    // Predicated region
    $region50: #{tpu_custom_call.1} parent=1 // pred_check
      _
    $region51: #{tpu_custom_call.1} parent=1 // pred_check_branch
      %888 = sbr.rel (0) target = $region53
    $region52: #{tpu_custom_call.1} parent=1 // pred_region
      %889 = dma.done [#allocation4], 2048
    $region53: #{tpu_custom_call.1} parent=1 // pred_fallthru
      _
    %890 = vsyncpa [#allocation3], 1
    %891 = vsyncpa [#allocation6], 1
    %892 = vsyncpa [#allocation9], 1
    %893 = vsyncpa [#allocation4], 1

</llo_original>
